<compile_context>
chip_gen: v5e
topology: v5e:2x2
jax: 0.10.0
libtpu: 0.0.40
codegen_flags: <defaults>
</compile_context>

<pallas_src>
import jax
import jax.numpy as jnp
from jax.experimental import pallas as pl
from jax.experimental.pallas import tpu as pltpu


def make_lstm_kernel(num_layers: int, hidden_size: int, seq_len: int, batch: int):
    """Build the Pallas kernel body for a `num_layers`-deep LSTM + final FC."""
    H = hidden_size
    S = seq_len
    B = batch

    def kernel(*refs):
        # refs = [x2d,
        #         wih0, whh0, b0,                      # layer 0
        #         (w_merged_l, b_l) for l in 1..L-1,   # upper layers
        #         wfc, bfc, out]
        idx = 0
        x_ref = refs[idx]; idx += 1
        wih0_ref = refs[idx]; whh0_ref = refs[idx + 1]; b0_ref = refs[idx + 2]
        idx += 3
        upper_refs = []
        for _ in range(1, num_layers):
            upper_refs.append((refs[idx], refs[idx + 1]))
            idx += 2
        wfc_ref = refs[idx]
        bfc_ref = refs[idx + 1]
        out_ref = refs[idx + 2]

        # ---- Activation constants (hoisted): gate order is i,f,o,g, so lanes
        # [0, 3H) are sigmoid gates and [3H, 4H) is the tanh gate.  Use
        # sigmoid(x) = 0.5 * tanh(0.5 * x) + 0.5 so ONE tanh pass covers all
        # 128 lanes; the lane-dependent scale/shift is cheap VALU work.
        lane = jax.lax.broadcasted_iota(jnp.int32, (B, 4 * H), 1)
        is_sig = lane < 3 * H
        m_b = jnp.where(is_sig, jnp.float32(0.5), jnp.float32(1.0))
        a_b = jnp.where(is_sig, jnp.float32(0.5), jnp.float32(0.0))

        def act_split(gates):
            t = jnp.tanh(gates * m_b)
            act = t * m_b + a_b
            i = act[:, 0:H]
            f = act[:, H:2 * H]
            o = act[:, 2 * H:3 * H]
            g = act[:, 3 * H:4 * H]
            return i, f, o, g

        # ---- Hoisted weight loads / bias broadcasts. -------------------------
        whh0 = whh0_ref[...]                              # (H, 4H) bf16
        wms = [w_ref[...] for (w_ref, _) in upper_refs]   # (2H, 4H) bf16
        bbs = [jnp.broadcast_to(b_ref[...], (B, 4 * H)) for (_, b_ref) in upper_refs]

        # ---- Layer-0 input projection hoisted out of the recurrence:
        # (S*B, I) @ (I, 4H) + bias, once for the whole sequence (bf16 MXU,
        # f32 accumulate).  Only h @ Whh stays on the serial chain for layer 0.
        xproj0 = (jnp.dot(x_ref[...], wih0_ref[...],
                          preferred_element_type=jnp.float32)
                  + b0_ref[...])                          # (S*B, 4H) f32

        hs = [None] * num_layers
        cs = [None] * num_layers

        # ---- Fully unrolled time loop (S is static & small). -----------------
        for t in range(S):
            gslice = xproj0[t * B:(t + 1) * B, :]
            if t == 0:
                # h0 = 0  =>  no recurrent matmul; c0 = 0 => c = i*g.
                gates = gslice
            else:
                gates = gslice + jnp.dot(hs[0].astype(jnp.bfloat16), whh0,
                                         preferred_element_type=jnp.float32)
            i, f, o, g = act_split(gates)
            cs[0] = i * g if t == 0 else f * cs[0] + i * g
            hs[0] = o * jnp.tanh(cs[0])
            inp = hs[0]

            for l in range(1, num_layers):
                inp_bf = inp.astype(jnp.bfloat16)
                if t == 0:
                    # h = 0: only the Wih half of the merged weight matters.
                    gates = (jnp.dot(inp_bf, wms[l - 1][0:H, :],
                                     preferred_element_type=jnp.float32)
                             + bbs[l - 1])
                else:
                    lhs = jnp.concatenate([inp_bf, hs[l].astype(jnp.bfloat16)],
                                          axis=1)                 # (B, 2H)
                    gates = (jnp.dot(lhs, wms[l - 1],
                                     preferred_element_type=jnp.float32)
                             + bbs[l - 1])
                i, f, o, g = act_split(gates)
                cs[l] = i * g if t == 0 else f * cs[l] + i * g
                hs[l] = o * jnp.tanh(cs[l])
                inp = hs[l]

        # out[:, -1, :] of the top layer -> final FC (kept in f32; tiny).
        out = (jnp.dot(hs[-1], wfc_ref[...], preferred_element_type=jnp.float32)
               + bfc_ref[...])
        out_ref[...] = out.astype(out_ref.dtype)

    return kernel


def orbit_predictor_lstm(x, layer_params, wfc, bfc, *, hidden_size):
    """x: (B, S, I) float32 (PyTorch batch_first layout).  Returns (B, O).

    layer_params[l] = (wih (4,in,H), whh (4,H,H), b (4,1,H)) with PyTorch gate
    order i,f,g,o and b = b_ih + b_hh pre-folded (fold real checkpoints before
    packing).
    """
    num_layers = len(layer_params)
    B, S, I = x.shape
    O = wfc.shape[1]
    H = hidden_size

    # Pad batch up to a multiple of 8 sublanes; padded rows are independent
    # and sliced off after the kernel.
    B_pad = max(8, ((B + 7) // 8) * 8)

    # Time-major, pre-flattened (S*B_pad, I) input so the kernel never reshapes.
    x_sbi = jnp.transpose(x, (1, 0, 2))                   # (S, B, I)
    if B_pad != B:
        x_sbi = jnp.pad(x_sbi, ((0, 0), (0, B_pad - B), (0, 0)))
    x2d = x_sbi.reshape(S * B_pad, I).astype(jnp.bfloat16)

    # Gate-fused weight layout with gate order i,f,o,g along lanes (so sigmoid
    # gates occupy lanes [0,3H) and the tanh gate lanes [3H,4H)).
    perm = jnp.array([0, 1, 3, 2])                        # i,f,g,o -> i,f,o,g
    packed = []
    for l, (wih, whh, b) in enumerate(layer_params):
        in_dim = wih.shape[1]
        wih_all = jnp.transpose(wih[perm], (1, 0, 2)).reshape(in_dim, 4 * H)
        whh_all = jnp.transpose(whh[perm], (1, 0, 2)).reshape(H, 4 * H)
        b_all = jnp.transpose(b[perm], (1, 0, 2)).reshape(1, 4 * H)
        if l == 0:
            packed += [wih_all.astype(jnp.bfloat16),
                       whh_all.astype(jnp.bfloat16),
                       b_all.astype(jnp.float32)]
        else:
            # Merge Wih / Whh along K: one (B,2H)@(2H,4H) matmul per cell.
            w_merged = jnp.concatenate([wih_all, whh_all], axis=0)
            packed += [w_merged.astype(jnp.bfloat16), b_all.astype(jnp.float32)]

    kernel = make_lstm_kernel(num_layers, H, S, B_pad)
    n_in = 1 + 3 + 2 * (num_layers - 1) + 2
    vmem_spec = pl.BlockSpec(memory_space=pltpu.MemorySpace.VMEM)

    out = pl.pallas_call(
        kernel,
        out_shape=jax.ShapeDtypeStruct((B_pad, O), jnp.float32),
        in_specs=[vmem_spec] * n_in,
        out_specs=vmem_spec,
    )(x2d, *packed, wfc, bfc)
    return out[:B]


def reference_lstm(x, layer_params, wfc, bfc, matmul_dtype=jnp.bfloat16):
    """Pure-JAX reference (PyTorch LSTM semantics), matmul operands in
    `matmul_dtype` with f32 accumulation to match the kernel's MXU math."""
    B, S, _ = x.shape
    H = layer_params[0][1].shape[1]

    def mm(a, w):
        return jnp.dot(a.astype(matmul_dtype), w.astype(matmul_dtype),
                       preferred_element_type=jnp.float32)

    hs = [jnp.zeros((B, H), jnp.float32) for _ in layer_params]
    cs = [jnp.zeros((B, H), jnp.float32) for _ in layer_params]
    for t in range(S):
        inp = x[:, t, :]
        for l, (wih, whh, b) in enumerate(layer_params):
            def gate(k):
                return mm(inp, wih[k]) + mm(hs[l], whh[k]) + b[k]
            i = jax.nn.sigmoid(gate(0))
            f = jax.nn.sigmoid(gate(1))
            g = jnp.tanh(gate(2))
            o = jax.nn.sigmoid(gate(3))
            cs[l] = f * cs[l] + i * g
            hs[l] = o * jnp.tanh(cs[l])
            inp = hs[l]
    return hs[-1] @ wfc + bfc


if __name__ == "__main__":
    # Small, module-consistent shapes.
    B, S = 2, 8
    input_size, hidden_size, output_size, num_layers = 6, 32, 6, 2

    key = jax.random.PRNGKey(0)
    k_x, k_w = jax.random.split(key)
    x = jax.random.normal(k_x, (B, S, input_size), dtype=jnp.float32)

    # Deterministic parameter init (PyTorch-style U(-1/sqrt(H), 1/sqrt(H))).
    bound = 1.0 / jnp.sqrt(jnp.float32(hidden_size))
    layer_params = []
    for l in range(num_layers):
        in_dim = input_size if l == 0 else hidden_size
        k_w, k1, k2, k3 = jax.random.split(k_w, 4)
        wih = jax.random.uniform(k1, (4, in_dim, hidden_size),
                                 minval=-bound, maxval=bound, dtype=jnp.float32)
        whh = jax.random.uniform(k2, (4, hidden_size, hidden_size),
                                 minval=-bound, maxval=bound, dtype=jnp.float32)
        # b = b_ih + b_hh folded into a single (4, 1, H) bias.
        b = jax.random.uniform(k3, (4, 1, hidden_size),
                               minval=-2 * bound, maxval=2 * bound, dtype=jnp.float32)
        layer_params.append((wih, whh, b))
    k_w, k4, k5 = jax.random.split(k_w, 3)
    wfc = jax.random.uniform(k4, (hidden_size, output_size),
                             minval=-bound, maxval=bound, dtype=jnp.float32)
    bfc = jax.random.uniform(k5, (1, output_size),
                             minval=-bound, maxval=bound, dtype=jnp.float32)

    out = orbit_predictor_lstm(x, layer_params, wfc, bfc, hidden_size=hidden_size)
    out = jax.block_until_ready(out)

    ref = reference_lstm(x, layer_params, wfc, bfc)   # matching bf16-matmul math
    assert out.shape == (B, output_size)
    assert jnp.allclose(out, ref, atol=1e-3, rtol=1e-3), "mismatch vs JAX reference"

    print("KERNEL_OK")
</pallas_src>

<mosaic_0001>
module attributes {stable_mosaic.version = 11 : i64} {
  func.func @kernel(%arg0: memref<64x6xbf16, #tpu.memory_space<vmem>>, %arg1: memref<6x128xbf16, #tpu.memory_space<vmem>>, %arg2: memref<32x128xbf16, #tpu.memory_space<vmem>>, %arg3: memref<1x128xf32, #tpu.memory_space<vmem>>, %arg4: memref<64x128xbf16, #tpu.memory_space<vmem>>, %arg5: memref<1x128xf32, #tpu.memory_space<vmem>>, %arg6: memref<32x6xf32, #tpu.memory_space<vmem>>, %arg7: memref<1x6xf32, #tpu.memory_space<vmem>>, %arg8: memref<8x6xf32, #tpu.memory_space<vmem>>) attributes {dimension_semantics = [], scalar_prefetch = 0 : i64, scratch_operands = 0 : i64, tpu.core_type = #tpu.core_type<tc>} {
    %0 = tpu.iota {dimensions = array<i32: 1>} : vector<8x128xi32>
    %c96_i32 = arith.constant 96 : i32
    %1 = vector.broadcast %c96_i32 : i32 to vector<8x128xi32>
    %2 = arith.cmpi slt, %0, %1 : vector<8x128xi32>
    %cst = arith.constant 5.000000e-01 : f32
    %cst_0 = arith.constant 1.000000e+00 : f32
    %3 = vector.broadcast %cst : f32 to vector<8x128xf32>
    %4 = vector.broadcast %cst_0 : f32 to vector<8x128xf32>
    %5 = arith.select %2, %3, %4 : vector<8x128xi1>, vector<8x128xf32>
    %cst_1 = arith.constant 5.000000e-01 : f32
    %cst_2 = arith.constant 0.000000e+00 : f32
    %6 = vector.broadcast %cst_1 : f32 to vector<8x128xf32>
    %7 = vector.broadcast %cst_2 : f32 to vector<8x128xf32>
    %8 = arith.select %2, %6, %7 : vector<8x128xi1>, vector<8x128xf32>
    %c0 = arith.constant 0 : index
    %c0_3 = arith.constant 0 : index
    %9 = vector.load %arg2[%c0, %c0_3] : memref<32x128xbf16, #tpu.memory_space<vmem>>, vector<32x128xbf16>
    %c0_4 = arith.constant 0 : index
    %c0_5 = arith.constant 0 : index
    %10 = vector.load %arg4[%c0_4, %c0_5] : memref<64x128xbf16, #tpu.memory_space<vmem>>, vector<64x128xbf16>
    %c0_6 = arith.constant 0 : index
    %c0_7 = arith.constant 0 : index
    %11 = vector.load %arg5[%c0_6, %c0_7] : memref<1x128xf32, #tpu.memory_space<vmem>>, vector<1x128xf32>
    %12 = vector.shape_cast %11 : vector<1x128xf32> to vector<1x128xf32>
    %13 = vector.broadcast %12 : vector<1x128xf32> to vector<8x128xf32>
    %c0_8 = arith.constant 0 : index
    %c0_9 = arith.constant 0 : index
    %14 = vector.load %arg0[%c0_8, %c0_9] : memref<64x6xbf16, #tpu.memory_space<vmem>>, vector<64x6xbf16>
    %c0_10 = arith.constant 0 : index
    %c0_11 = arith.constant 0 : index
    %15 = vector.load %arg1[%c0_10, %c0_11] : memref<6x128xbf16, #tpu.memory_space<vmem>>, vector<6x128xbf16>
    %cst_12 = arith.constant dense<0.000000e+00> : vector<64x128xf32>
    %16 = tpu.matmul %14, %15, %cst_12 {dimension_numbers = #tpu.dot_dimension_numbers<[1], [0], [0], [1], [0, 0, 1, 1], [], []>} : vector<64x6xbf16>, vector<6x128xbf16>, vector<64x128xf32> -> vector<64x128xf32>
    %c0_13 = arith.constant 0 : index
    %c0_14 = arith.constant 0 : index
    %17 = vector.load %arg3[%c0_13, %c0_14] : memref<1x128xf32, #tpu.memory_space<vmem>>, vector<1x128xf32>
    %18 = vector.broadcast %17 : vector<1x128xf32> to vector<64x128xf32>
    %19 = arith.addf %16, %18 : vector<64x128xf32>
    %20 = vector.extract_strided_slice %19 {offsets = [0, 0], sizes = [8, 128], strides = [1, 1]} : vector<64x128xf32> to vector<8x128xf32>
    %21 = arith.mulf %20, %5 : vector<8x128xf32>
    %22 = math.tanh %21 : vector<8x128xf32>
    %23 = arith.mulf %22, %5 : vector<8x128xf32>
    %24 = arith.addf %23, %8 : vector<8x128xf32>
    %25 = vector.extract_strided_slice %24 {offsets = [0, 0], sizes = [8, 32], strides = [1, 1]} : vector<8x128xf32> to vector<8x32xf32>
    %26 = vector.extract_strided_slice %24 {offsets = [0, 64], sizes = [8, 32], strides = [1, 1]} : vector<8x128xf32> to vector<8x32xf32>
    %27 = vector.extract_strided_slice %24 {offsets = [0, 96], sizes = [8, 32], strides = [1, 1]} : vector<8x128xf32> to vector<8x32xf32>
    %28 = arith.mulf %25, %27 : vector<8x32xf32>
    %29 = math.tanh %28 : vector<8x32xf32>
    %30 = arith.mulf %26, %29 : vector<8x32xf32>
    %31 = arith.truncf %30 : vector<8x32xf32> to vector<8x32xbf16>
    %32 = vector.extract_strided_slice %10 {offsets = [0, 0], sizes = [32, 128], strides = [1, 1]} : vector<64x128xbf16> to vector<32x128xbf16>
    %cst_15 = arith.constant dense<0.000000e+00> : vector<8x128xf32>
    %33 = tpu.matmul %31, %32, %cst_15 {dimension_numbers = #tpu.dot_dimension_numbers<[1], [0], [0], [1], [0, 0, 1, 1], [], []>} : vector<8x32xbf16>, vector<32x128xbf16>, vector<8x128xf32> -> vector<8x128xf32>
    %34 = arith.addf %33, %13 : vector<8x128xf32>
    %35 = arith.mulf %34, %5 : vector<8x128xf32>
    %36 = math.tanh %35 : vector<8x128xf32>
    %37 = arith.mulf %36, %5 : vector<8x128xf32>
    %38 = arith.addf %37, %8 : vector<8x128xf32>
    %39 = vector.extract_strided_slice %38 {offsets = [0, 0], sizes = [8, 32], strides = [1, 1]} : vector<8x128xf32> to vector<8x32xf32>
    %40 = vector.extract_strided_slice %38 {offsets = [0, 64], sizes = [8, 32], strides = [1, 1]} : vector<8x128xf32> to vector<8x32xf32>
    %41 = vector.extract_strided_slice %38 {offsets = [0, 96], sizes = [8, 32], strides = [1, 1]} : vector<8x128xf32> to vector<8x32xf32>
    %42 = arith.mulf %39, %41 : vector<8x32xf32>
    %43 = math.tanh %42 : vector<8x32xf32>
    %44 = arith.mulf %40, %43 : vector<8x32xf32>
    %45 = vector.extract_strided_slice %19 {offsets = [8, 0], sizes = [8, 128], strides = [1, 1]} : vector<64x128xf32> to vector<8x128xf32>
    %46 = arith.truncf %30 : vector<8x32xf32> to vector<8x32xbf16>
    %cst_16 = arith.constant dense<0.000000e+00> : vector<8x128xf32>
    %47 = tpu.matmul %46, %9, %cst_16 {dimension_numbers = #tpu.dot_dimension_numbers<[1], [0], [0], [1], [0, 0, 1, 1], [], []>} : vector<8x32xbf16>, vector<32x128xbf16>, vector<8x128xf32> -> vector<8x128xf32>
    %48 = arith.addf %45, %47 : vector<8x128xf32>
    %49 = arith.mulf %48, %5 : vector<8x128xf32>
    %50 = math.tanh %49 : vector<8x128xf32>
    %51 = arith.mulf %50, %5 : vector<8x128xf32>
    %52 = arith.addf %51, %8 : vector<8x128xf32>
    %53 = vector.extract_strided_slice %52 {offsets = [0, 0], sizes = [8, 32], strides = [1, 1]} : vector<8x128xf32> to vector<8x32xf32>
    %54 = vector.extract_strided_slice %52 {offsets = [0, 32], sizes = [8, 32], strides = [1, 1]} : vector<8x128xf32> to vector<8x32xf32>
    %55 = vector.extract_strided_slice %52 {offsets = [0, 64], sizes = [8, 32], strides = [1, 1]} : vector<8x128xf32> to vector<8x32xf32>
    %56 = vector.extract_strided_slice %52 {offsets = [0, 96], sizes = [8, 32], strides = [1, 1]} : vector<8x128xf32> to vector<8x32xf32>
    %57 = arith.mulf %54, %28 : vector<8x32xf32>
    %58 = arith.mulf %53, %56 : vector<8x32xf32>
    %59 = arith.addf %57, %58 : vector<8x32xf32>
    %60 = math.tanh %59 : vector<8x32xf32>
    %61 = arith.mulf %55, %60 : vector<8x32xf32>
    %62 = arith.truncf %61 : vector<8x32xf32> to vector<8x32xbf16>
    %63 = arith.truncf %44 : vector<8x32xf32> to vector<8x32xbf16>
    %64 = tpu.concatenate %62, %63 in 1 : vector<8x32xbf16>, vector<8x32xbf16> -> vector<8x64xbf16>
    %cst_17 = arith.constant dense<0.000000e+00> : vector<8x128xf32>
    %65 = tpu.matmul %64, %10, %cst_17 {dimension_numbers = #tpu.dot_dimension_numbers<[1], [0], [0], [1], [0, 0, 1, 1], [], []>} : vector<8x64xbf16>, vector<64x128xbf16>, vector<8x128xf32> -> vector<8x128xf32>
    %66 = arith.addf %65, %13 : vector<8x128xf32>
    %67 = arith.mulf %66, %5 : vector<8x128xf32>
    %68 = math.tanh %67 : vector<8x128xf32>
    %69 = arith.mulf %68, %5 : vector<8x128xf32>
    %70 = arith.addf %69, %8 : vector<8x128xf32>
    %71 = vector.extract_strided_slice %70 {offsets = [0, 0], sizes = [8, 32], strides = [1, 1]} : vector<8x128xf32> to vector<8x32xf32>
    %72 = vector.extract_strided_slice %70 {offsets = [0, 32], sizes = [8, 32], strides = [1, 1]} : vector<8x128xf32> to vector<8x32xf32>
    %73 = vector.extract_strided_slice %70 {offsets = [0, 64], sizes = [8, 32], strides = [1, 1]} : vector<8x128xf32> to vector<8x32xf32>
    %74 = vector.extract_strided_slice %70 {offsets = [0, 96], sizes = [8, 32], strides = [1, 1]} : vector<8x128xf32> to vector<8x32xf32>
    %75 = arith.mulf %72, %42 : vector<8x32xf32>
    %76 = arith.mulf %71, %74 : vector<8x32xf32>
    %77 = arith.addf %75, %76 : vector<8x32xf32>
    %78 = math.tanh %77 : vector<8x32xf32>
    %79 = arith.mulf %73, %78 : vector<8x32xf32>
    %80 = vector.extract_strided_slice %19 {offsets = [16, 0], sizes = [8, 128], strides = [1, 1]} : vector<64x128xf32> to vector<8x128xf32>
    %81 = arith.truncf %61 : vector<8x32xf32> to vector<8x32xbf16>
    %cst_18 = arith.constant dense<0.000000e+00> : vector<8x128xf32>
    %82 = tpu.matmul %81, %9, %cst_18 {dimension_numbers = #tpu.dot_dimension_numbers<[1], [0], [0], [1], [0, 0, 1, 1], [], []>} : vector<8x32xbf16>, vector<32x128xbf16>, vector<8x128xf32> -> vector<8x128xf32>
    %83 = arith.addf %80, %82 : vector<8x128xf32>
    %84 = arith.mulf %83, %5 : vector<8x128xf32>
    %85 = math.tanh %84 : vector<8x128xf32>
    %86 = arith.mulf %85, %5 : vector<8x128xf32>
    %87 = arith.addf %86, %8 : vector<8x128xf32>
    %88 = vector.extract_strided_slice %87 {offsets = [0, 0], sizes = [8, 32], strides = [1, 1]} : vector<8x128xf32> to vector<8x32xf32>
    %89 = vector.extract_strided_slice %87 {offsets = [0, 32], sizes = [8, 32], strides = [1, 1]} : vector<8x128xf32> to vector<8x32xf32>
    %90 = vector.extract_strided_slice %87 {offsets = [0, 64], sizes = [8, 32], strides = [1, 1]} : vector<8x128xf32> to vector<8x32xf32>
    %91 = vector.extract_strided_slice %87 {offsets = [0, 96], sizes = [8, 32], strides = [1, 1]} : vector<8x128xf32> to vector<8x32xf32>
    %92 = arith.mulf %89, %59 : vector<8x32xf32>
    %93 = arith.mulf %88, %91 : vector<8x32xf32>
    %94 = arith.addf %92, %93 : vector<8x32xf32>
    %95 = math.tanh %94 : vector<8x32xf32>
    %96 = arith.mulf %90, %95 : vector<8x32xf32>
    %97 = arith.truncf %96 : vector<8x32xf32> to vector<8x32xbf16>
    %98 = arith.truncf %79 : vector<8x32xf32> to vector<8x32xbf16>
    %99 = tpu.concatenate %97, %98 in 1 : vector<8x32xbf16>, vector<8x32xbf16> -> vector<8x64xbf16>
    %cst_19 = arith.constant dense<0.000000e+00> : vector<8x128xf32>
    %100 = tpu.matmul %99, %10, %cst_19 {dimension_numbers = #tpu.dot_dimension_numbers<[1], [0], [0], [1], [0, 0, 1, 1], [], []>} : vector<8x64xbf16>, vector<64x128xbf16>, vector<8x128xf32> -> vector<8x128xf32>
    %101 = arith.addf %100, %13 : vector<8x128xf32>
    %102 = arith.mulf %101, %5 : vector<8x128xf32>
    %103 = math.tanh %102 : vector<8x128xf32>
    %104 = arith.mulf %103, %5 : vector<8x128xf32>
    %105 = arith.addf %104, %8 : vector<8x128xf32>
    %106 = vector.extract_strided_slice %105 {offsets = [0, 0], sizes = [8, 32], strides = [1, 1]} : vector<8x128xf32> to vector<8x32xf32>
    %107 = vector.extract_strided_slice %105 {offsets = [0, 32], sizes = [8, 32], strides = [1, 1]} : vector<8x128xf32> to vector<8x32xf32>
    %108 = vector.extract_strided_slice %105 {offsets = [0, 64], sizes = [8, 32], strides = [1, 1]} : vector<8x128xf32> to vector<8x32xf32>
    %109 = vector.extract_strided_slice %105 {offsets = [0, 96], sizes = [8, 32], strides = [1, 1]} : vector<8x128xf32> to vector<8x32xf32>
    %110 = arith.mulf %107, %77 : vector<8x32xf32>
    %111 = arith.mulf %106, %109 : vector<8x32xf32>
    %112 = arith.addf %110, %111 : vector<8x32xf32>
    %113 = math.tanh %112 : vector<8x32xf32>
    %114 = arith.mulf %108, %113 : vector<8x32xf32>
    %115 = vector.extract_strided_slice %19 {offsets = [24, 0], sizes = [8, 128], strides = [1, 1]} : vector<64x128xf32> to vector<8x128xf32>
    %116 = arith.truncf %96 : vector<8x32xf32> to vector<8x32xbf16>
    %cst_20 = arith.constant dense<0.000000e+00> : vector<8x128xf32>
    %117 = tpu.matmul %116, %9, %cst_20 {dimension_numbers = #tpu.dot_dimension_numbers<[1], [0], [0], [1], [0, 0, 1, 1], [], []>} : vector<8x32xbf16>, vector<32x128xbf16>, vector<8x128xf32> -> vector<8x128xf32>
    %118 = arith.addf %115, %117 : vector<8x128xf32>
    %119 = arith.mulf %118, %5 : vector<8x128xf32>
    %120 = math.tanh %119 : vector<8x128xf32>
    %121 = arith.mulf %120, %5 : vector<8x128xf32>
    %122 = arith.addf %121, %8 : vector<8x128xf32>
    %123 = vector.extract_strided_slice %122 {offsets = [0, 0], sizes = [8, 32], strides = [1, 1]} : vector<8x128xf32> to vector<8x32xf32>
    %124 = vector.extract_strided_slice %122 {offsets = [0, 32], sizes = [8, 32], strides = [1, 1]} : vector<8x128xf32> to vector<8x32xf32>
    %125 = vector.extract_strided_slice %122 {offsets = [0, 64], sizes = [8, 32], strides = [1, 1]} : vector<8x128xf32> to vector<8x32xf32>
    %126 = vector.extract_strided_slice %122 {offsets = [0, 96], sizes = [8, 32], strides = [1, 1]} : vector<8x128xf32> to vector<8x32xf32>
    %127 = arith.mulf %124, %94 : vector<8x32xf32>
    %128 = arith.mulf %123, %126 : vector<8x32xf32>
    %129 = arith.addf %127, %128 : vector<8x32xf32>
    %130 = math.tanh %129 : vector<8x32xf32>
    %131 = arith.mulf %125, %130 : vector<8x32xf32>
    %132 = arith.truncf %131 : vector<8x32xf32> to vector<8x32xbf16>
    %133 = arith.truncf %114 : vector<8x32xf32> to vector<8x32xbf16>
    %134 = tpu.concatenate %132, %133 in 1 : vector<8x32xbf16>, vector<8x32xbf16> -> vector<8x64xbf16>
    %cst_21 = arith.constant dense<0.000000e+00> : vector<8x128xf32>
    %135 = tpu.matmul %134, %10, %cst_21 {dimension_numbers = #tpu.dot_dimension_numbers<[1], [0], [0], [1], [0, 0, 1, 1], [], []>} : vector<8x64xbf16>, vector<64x128xbf16>, vector<8x128xf32> -> vector<8x128xf32>
    %136 = arith.addf %135, %13 : vector<8x128xf32>
    %137 = arith.mulf %136, %5 : vector<8x128xf32>
    %138 = math.tanh %137 : vector<8x128xf32>
    %139 = arith.mulf %138, %5 : vector<8x128xf32>
    %140 = arith.addf %139, %8 : vector<8x128xf32>
    %141 = vector.extract_strided_slice %140 {offsets = [0, 0], sizes = [8, 32], strides = [1, 1]} : vector<8x128xf32> to vector<8x32xf32>
    %142 = vector.extract_strided_slice %140 {offsets = [0, 32], sizes = [8, 32], strides = [1, 1]} : vector<8x128xf32> to vector<8x32xf32>
    %143 = vector.extract_strided_slice %140 {offsets = [0, 64], sizes = [8, 32], strides = [1, 1]} : vector<8x128xf32> to vector<8x32xf32>
    %144 = vector.extract_strided_slice %140 {offsets = [0, 96], sizes = [8, 32], strides = [1, 1]} : vector<8x128xf32> to vector<8x32xf32>
    %145 = arith.mulf %142, %112 : vector<8x32xf32>
    %146 = arith.mulf %141, %144 : vector<8x32xf32>
    %147 = arith.addf %145, %146 : vector<8x32xf32>
    %148 = math.tanh %147 : vector<8x32xf32>
    %149 = arith.mulf %143, %148 : vector<8x32xf32>
    %150 = vector.extract_strided_slice %19 {offsets = [32, 0], sizes = [8, 128], strides = [1, 1]} : vector<64x128xf32> to vector<8x128xf32>
    %151 = arith.truncf %131 : vector<8x32xf32> to vector<8x32xbf16>
    %cst_22 = arith.constant dense<0.000000e+00> : vector<8x128xf32>
    %152 = tpu.matmul %151, %9, %cst_22 {dimension_numbers = #tpu.dot_dimension_numbers<[1], [0], [0], [1], [0, 0, 1, 1], [], []>} : vector<8x32xbf16>, vector<32x128xbf16>, vector<8x128xf32> -> vector<8x128xf32>
    %153 = arith.addf %150, %152 : vector<8x128xf32>
    %154 = arith.mulf %153, %5 : vector<8x128xf32>
    %155 = math.tanh %154 : vector<8x128xf32>
    %156 = arith.mulf %155, %5 : vector<8x128xf32>
    %157 = arith.addf %156, %8 : vector<8x128xf32>
    %158 = vector.extract_strided_slice %157 {offsets = [0, 0], sizes = [8, 32], strides = [1, 1]} : vector<8x128xf32> to vector<8x32xf32>
    %159 = vector.extract_strided_slice %157 {offsets = [0, 32], sizes = [8, 32], strides = [1, 1]} : vector<8x128xf32> to vector<8x32xf32>
    %160 = vector.extract_strided_slice %157 {offsets = [0, 64], sizes = [8, 32], strides = [1, 1]} : vector<8x128xf32> to vector<8x32xf32>
    %161 = vector.extract_strided_slice %157 {offsets = [0, 96], sizes = [8, 32], strides = [1, 1]} : vector<8x128xf32> to vector<8x32xf32>
    %162 = arith.mulf %159, %129 : vector<8x32xf32>
    %163 = arith.mulf %158, %161 : vector<8x32xf32>
    %164 = arith.addf %162, %163 : vector<8x32xf32>
    %165 = math.tanh %164 : vector<8x32xf32>
    %166 = arith.mulf %160, %165 : vector<8x32xf32>
    %167 = arith.truncf %166 : vector<8x32xf32> to vector<8x32xbf16>
    %168 = arith.truncf %149 : vector<8x32xf32> to vector<8x32xbf16>
    %169 = tpu.concatenate %167, %168 in 1 : vector<8x32xbf16>, vector<8x32xbf16> -> vector<8x64xbf16>
    %cst_23 = arith.constant dense<0.000000e+00> : vector<8x128xf32>
    %170 = tpu.matmul %169, %10, %cst_23 {dimension_numbers = #tpu.dot_dimension_numbers<[1], [0], [0], [1], [0, 0, 1, 1], [], []>} : vector<8x64xbf16>, vector<64x128xbf16>, vector<8x128xf32> -> vector<8x128xf32>
    %171 = arith.addf %170, %13 : vector<8x128xf32>
    %172 = arith.mulf %171, %5 : vector<8x128xf32>
    %173 = math.tanh %172 : vector<8x128xf32>
    %174 = arith.mulf %173, %5 : vector<8x128xf32>
    %175 = arith.addf %174, %8 : vector<8x128xf32>
    %176 = vector.extract_strided_slice %175 {offsets = [0, 0], sizes = [8, 32], strides = [1, 1]} : vector<8x128xf32> to vector<8x32xf32>
    %177 = vector.extract_strided_slice %175 {offsets = [0, 32], sizes = [8, 32], strides = [1, 1]} : vector<8x128xf32> to vector<8x32xf32>
    %178 = vector.extract_strided_slice %175 {offsets = [0, 64], sizes = [8, 32], strides = [1, 1]} : vector<8x128xf32> to vector<8x32xf32>
    %179 = vector.extract_strided_slice %175 {offsets = [0, 96], sizes = [8, 32], strides = [1, 1]} : vector<8x128xf32> to vector<8x32xf32>
    %180 = arith.mulf %177, %147 : vector<8x32xf32>
    %181 = arith.mulf %176, %179 : vector<8x32xf32>
    %182 = arith.addf %180, %181 : vector<8x32xf32>
    %183 = math.tanh %182 : vector<8x32xf32>
    %184 = arith.mulf %178, %183 : vector<8x32xf32>
    %185 = vector.extract_strided_slice %19 {offsets = [40, 0], sizes = [8, 128], strides = [1, 1]} : vector<64x128xf32> to vector<8x128xf32>
    %186 = arith.truncf %166 : vector<8x32xf32> to vector<8x32xbf16>
    %cst_24 = arith.constant dense<0.000000e+00> : vector<8x128xf32>
    %187 = tpu.matmul %186, %9, %cst_24 {dimension_numbers = #tpu.dot_dimension_numbers<[1], [0], [0], [1], [0, 0, 1, 1], [], []>} : vector<8x32xbf16>, vector<32x128xbf16>, vector<8x128xf32> -> vector<8x128xf32>
    %188 = arith.addf %185, %187 : vector<8x128xf32>
    %189 = arith.mulf %188, %5 : vector<8x128xf32>
    %190 = math.tanh %189 : vector<8x128xf32>
    %191 = arith.mulf %190, %5 : vector<8x128xf32>
    %192 = arith.addf %191, %8 : vector<8x128xf32>
    %193 = vector.extract_strided_slice %192 {offsets = [0, 0], sizes = [8, 32], strides = [1, 1]} : vector<8x128xf32> to vector<8x32xf32>
    %194 = vector.extract_strided_slice %192 {offsets = [0, 32], sizes = [8, 32], strides = [1, 1]} : vector<8x128xf32> to vector<8x32xf32>
    %195 = vector.extract_strided_slice %192 {offsets = [0, 64], sizes = [8, 32], strides = [1, 1]} : vector<8x128xf32> to vector<8x32xf32>
    %196 = vector.extract_strided_slice %192 {offsets = [0, 96], sizes = [8, 32], strides = [1, 1]} : vector<8x128xf32> to vector<8x32xf32>
    %197 = arith.mulf %194, %164 : vector<8x32xf32>
    %198 = arith.mulf %193, %196 : vector<8x32xf32>
    %199 = arith.addf %197, %198 : vector<8x32xf32>
    %200 = math.tanh %199 : vector<8x32xf32>
    %201 = arith.mulf %195, %200 : vector<8x32xf32>
    %202 = arith.truncf %201 : vector<8x32xf32> to vector<8x32xbf16>
    %203 = arith.truncf %184 : vector<8x32xf32> to vector<8x32xbf16>
    %204 = tpu.concatenate %202, %203 in 1 : vector<8x32xbf16>, vector<8x32xbf16> -> vector<8x64xbf16>
    %cst_25 = arith.constant dense<0.000000e+00> : vector<8x128xf32>
    %205 = tpu.matmul %204, %10, %cst_25 {dimension_numbers = #tpu.dot_dimension_numbers<[1], [0], [0], [1], [0, 0, 1, 1], [], []>} : vector<8x64xbf16>, vector<64x128xbf16>, vector<8x128xf32> -> vector<8x128xf32>
    %206 = arith.addf %205, %13 : vector<8x128xf32>
    %207 = arith.mulf %206, %5 : vector<8x128xf32>
    %208 = math.tanh %207 : vector<8x128xf32>
    %209 = arith.mulf %208, %5 : vector<8x128xf32>
    %210 = arith.addf %209, %8 : vector<8x128xf32>
    %211 = vector.extract_strided_slice %210 {offsets = [0, 0], sizes = [8, 32], strides = [1, 1]} : vector<8x128xf32> to vector<8x32xf32>
    %212 = vector.extract_strided_slice %210 {offsets = [0, 32], sizes = [8, 32], strides = [1, 1]} : vector<8x128xf32> to vector<8x32xf32>
    %213 = vector.extract_strided_slice %210 {offsets = [0, 64], sizes = [8, 32], strides = [1, 1]} : vector<8x128xf32> to vector<8x32xf32>
    %214 = vector.extract_strided_slice %210 {offsets = [0, 96], sizes = [8, 32], strides = [1, 1]} : vector<8x128xf32> to vector<8x32xf32>
    %215 = arith.mulf %212, %182 : vector<8x32xf32>
    %216 = arith.mulf %211, %214 : vector<8x32xf32>
    %217 = arith.addf %215, %216 : vector<8x32xf32>
    %218 = math.tanh %217 : vector<8x32xf32>
    %219 = arith.mulf %213, %218 : vector<8x32xf32>
    %220 = vector.extract_strided_slice %19 {offsets = [48, 0], sizes = [8, 128], strides = [1, 1]} : vector<64x128xf32> to vector<8x128xf32>
    %221 = arith.truncf %201 : vector<8x32xf32> to vector<8x32xbf16>
    %cst_26 = arith.constant dense<0.000000e+00> : vector<8x128xf32>
    %222 = tpu.matmul %221, %9, %cst_26 {dimension_numbers = #tpu.dot_dimension_numbers<[1], [0], [0], [1], [0, 0, 1, 1], [], []>} : vector<8x32xbf16>, vector<32x128xbf16>, vector<8x128xf32> -> vector<8x128xf32>
    %223 = arith.addf %220, %222 : vector<8x128xf32>
    %224 = arith.mulf %223, %5 : vector<8x128xf32>
    %225 = math.tanh %224 : vector<8x128xf32>
    %226 = arith.mulf %225, %5 : vector<8x128xf32>
    %227 = arith.addf %226, %8 : vector<8x128xf32>
    %228 = vector.extract_strided_slice %227 {offsets = [0, 0], sizes = [8, 32], strides = [1, 1]} : vector<8x128xf32> to vector<8x32xf32>
    %229 = vector.extract_strided_slice %227 {offsets = [0, 32], sizes = [8, 32], strides = [1, 1]} : vector<8x128xf32> to vector<8x32xf32>
    %230 = vector.extract_strided_slice %227 {offsets = [0, 64], sizes = [8, 32], strides = [1, 1]} : vector<8x128xf32> to vector<8x32xf32>
    %231 = vector.extract_strided_slice %227 {offsets = [0, 96], sizes = [8, 32], strides = [1, 1]} : vector<8x128xf32> to vector<8x32xf32>
    %232 = arith.mulf %229, %199 : vector<8x32xf32>
    %233 = arith.mulf %228, %231 : vector<8x32xf32>
    %234 = arith.addf %232, %233 : vector<8x32xf32>
    %235 = math.tanh %234 : vector<8x32xf32>
    %236 = arith.mulf %230, %235 : vector<8x32xf32>
    %237 = arith.truncf %236 : vector<8x32xf32> to vector<8x32xbf16>
    %238 = arith.truncf %219 : vector<8x32xf32> to vector<8x32xbf16>
    %239 = tpu.concatenate %237, %238 in 1 : vector<8x32xbf16>, vector<8x32xbf16> -> vector<8x64xbf16>
    %cst_27 = arith.constant dense<0.000000e+00> : vector<8x128xf32>
    %240 = tpu.matmul %239, %10, %cst_27 {dimension_numbers = #tpu.dot_dimension_numbers<[1], [0], [0], [1], [0, 0, 1, 1], [], []>} : vector<8x64xbf16>, vector<64x128xbf16>, vector<8x128xf32> -> vector<8x128xf32>
    %241 = arith.addf %240, %13 : vector<8x128xf32>
    %242 = arith.mulf %241, %5 : vector<8x128xf32>
    %243 = math.tanh %242 : vector<8x128xf32>
    %244 = arith.mulf %243, %5 : vector<8x128xf32>
    %245 = arith.addf %244, %8 : vector<8x128xf32>
    %246 = vector.extract_strided_slice %245 {offsets = [0, 0], sizes = [8, 32], strides = [1, 1]} : vector<8x128xf32> to vector<8x32xf32>
    %247 = vector.extract_strided_slice %245 {offsets = [0, 32], sizes = [8, 32], strides = [1, 1]} : vector<8x128xf32> to vector<8x32xf32>
    %248 = vector.extract_strided_slice %245 {offsets = [0, 64], sizes = [8, 32], strides = [1, 1]} : vector<8x128xf32> to vector<8x32xf32>
    %249 = vector.extract_strided_slice %245 {offsets = [0, 96], sizes = [8, 32], strides = [1, 1]} : vector<8x128xf32> to vector<8x32xf32>
    %250 = arith.mulf %247, %217 : vector<8x32xf32>
    %251 = arith.mulf %246, %249 : vector<8x32xf32>
    %252 = arith.addf %250, %251 : vector<8x32xf32>
    %253 = math.tanh %252 : vector<8x32xf32>
    %254 = arith.mulf %248, %253 : vector<8x32xf32>
    %255 = vector.extract_strided_slice %19 {offsets = [56, 0], sizes = [8, 128], strides = [1, 1]} : vector<64x128xf32> to vector<8x128xf32>
    %256 = arith.truncf %236 : vector<8x32xf32> to vector<8x32xbf16>
    %cst_28 = arith.constant dense<0.000000e+00> : vector<8x128xf32>
    %257 = tpu.matmul %256, %9, %cst_28 {dimension_numbers = #tpu.dot_dimension_numbers<[1], [0], [0], [1], [0, 0, 1, 1], [], []>} : vector<8x32xbf16>, vector<32x128xbf16>, vector<8x128xf32> -> vector<8x128xf32>
    %258 = arith.addf %255, %257 : vector<8x128xf32>
    %259 = arith.mulf %258, %5 : vector<8x128xf32>
    %260 = math.tanh %259 : vector<8x128xf32>
    %261 = arith.mulf %260, %5 : vector<8x128xf32>
    %262 = arith.addf %261, %8 : vector<8x128xf32>
    %263 = vector.extract_strided_slice %262 {offsets = [0, 0], sizes = [8, 32], strides = [1, 1]} : vector<8x128xf32> to vector<8x32xf32>
    %264 = vector.extract_strided_slice %262 {offsets = [0, 32], sizes = [8, 32], strides = [1, 1]} : vector<8x128xf32> to vector<8x32xf32>
    %265 = vector.extract_strided_slice %262 {offsets = [0, 64], sizes = [8, 32], strides = [1, 1]} : vector<8x128xf32> to vector<8x32xf32>
    %266 = vector.extract_strided_slice %262 {offsets = [0, 96], sizes = [8, 32], strides = [1, 1]} : vector<8x128xf32> to vector<8x32xf32>
    %267 = arith.mulf %264, %234 : vector<8x32xf32>
    %268 = arith.mulf %263, %266 : vector<8x32xf32>
    %269 = arith.addf %267, %268 : vector<8x32xf32>
    %270 = math.tanh %269 : vector<8x32xf32>
    %271 = arith.mulf %265, %270 : vector<8x32xf32>
    %272 = arith.truncf %271 : vector<8x32xf32> to vector<8x32xbf16>
    %273 = arith.truncf %254 : vector<8x32xf32> to vector<8x32xbf16>
    %274 = tpu.concatenate %272, %273 in 1 : vector<8x32xbf16>, vector<8x32xbf16> -> vector<8x64xbf16>
    %cst_29 = arith.constant dense<0.000000e+00> : vector<8x128xf32>
    %275 = tpu.matmul %274, %10, %cst_29 {dimension_numbers = #tpu.dot_dimension_numbers<[1], [0], [0], [1], [0, 0, 1, 1], [], []>} : vector<8x64xbf16>, vector<64x128xbf16>, vector<8x128xf32> -> vector<8x128xf32>
    %276 = arith.addf %275, %13 : vector<8x128xf32>
    %277 = arith.mulf %276, %5 : vector<8x128xf32>
    %278 = math.tanh %277 : vector<8x128xf32>
    %279 = arith.mulf %278, %5 : vector<8x128xf32>
    %280 = arith.addf %279, %8 : vector<8x128xf32>
    %281 = vector.extract_strided_slice %280 {offsets = [0, 0], sizes = [8, 32], strides = [1, 1]} : vector<8x128xf32> to vector<8x32xf32>
    %282 = vector.extract_strided_slice %280 {offsets = [0, 32], sizes = [8, 32], strides = [1, 1]} : vector<8x128xf32> to vector<8x32xf32>
    %283 = vector.extract_strided_slice %280 {offsets = [0, 64], sizes = [8, 32], strides = [1, 1]} : vector<8x128xf32> to vector<8x32xf32>
    %284 = vector.extract_strided_slice %280 {offsets = [0, 96], sizes = [8, 32], strides = [1, 1]} : vector<8x128xf32> to vector<8x32xf32>
    %285 = arith.mulf %282, %252 : vector<8x32xf32>
    %286 = arith.mulf %281, %284 : vector<8x32xf32>
    %287 = arith.addf %285, %286 : vector<8x32xf32>
    %288 = math.tanh %287 : vector<8x32xf32>
    %289 = arith.mulf %283, %288 : vector<8x32xf32>
    %c0_30 = arith.constant 0 : index
    %c0_31 = arith.constant 0 : index
    %290 = vector.load %arg6[%c0_30, %c0_31] : memref<32x6xf32, #tpu.memory_space<vmem>>, vector<32x6xf32>
    %cst_32 = arith.constant dense<0.000000e+00> : vector<8x6xf32>
    %291 = tpu.matmul %289, %290, %cst_32 {dimension_numbers = #tpu.dot_dimension_numbers<[1], [0], [0], [1], [0, 0, 1, 1], [], []>} : vector<8x32xf32>, vector<32x6xf32>, vector<8x6xf32> -> vector<8x6xf32>
    %c0_33 = arith.constant 0 : index
    %c0_34 = arith.constant 0 : index
    %292 = vector.load %arg7[%c0_33, %c0_34] : memref<1x6xf32, #tpu.memory_space<vmem>>, vector<1x6xf32>
    %293 = vector.broadcast %292 : vector<1x6xf32> to vector<8x6xf32>
    %294 = arith.addf %291, %293 : vector<8x6xf32>
    %c0_35 = arith.constant 0 : index
    %c0_36 = arith.constant 0 : index
    %295 = vector.load %arg8[%c0_35, %c0_36] : memref<8x6xf32, #tpu.memory_space<vmem>>, vector<8x6xf32>
    tpu.vector_store %arg8[%c0_35, %c0_36], %294 {strides = array<i32>} : memref<8x6xf32, #tpu.memory_space<vmem>>, vector<8x6xf32>,
    return
  }
}

</mosaic_0001>

<llo_original>
// kernel: tpu_custom_call.1
$region0: #{tpu_custom_call.1}
  #allocation0 [shape = 'u32[]', space=smem, size = 0x4, offset = 0x4, fixed_abs, tag = 'smem constant byte address 0x4 - core index']
  #allocation1 [shape = 'u32[72,128]{1,0:T(1,128)}', space=vmem, size = 0x9000, scoped, tag = 'internal scratch']
  %s0 = inlined_call_operand.vmem [shape: bf16[64,6], index: 0, kind: input, shape index: {}]
  %s1 = inlined_call_operand.vmem [shape: bf16[6,128], index: 1, kind: input, shape index: {}]
  %s2 = inlined_call_operand.vmem [shape: bf16[32,128], index: 2, kind: input, shape index: {}]
  %s3 = inlined_call_operand.vmem [shape: f32[1,128], index: 3, kind: input, shape index: {}]
  %s4 = inlined_call_operand.vmem [shape: bf16[64,128], index: 4, kind: input, shape index: {}]
  %s5 = inlined_call_operand.vmem [shape: f32[1,128], index: 5, kind: input, shape index: {}]
  %s6 = inlined_call_operand.vmem [shape: f32[32,6], index: 6, kind: input, shape index: {}]
  %s7 = inlined_call_operand.vmem [shape: f32[1,6], index: 7, kind: input, shape index: {}]
  %s8 = inlined_call_operand.hbm [shape: f32[8,6], index: 8, kind: output, shape index: {}]
  %s9 = sld [smem:[#allocation0]]
  $region42: #{tpu_custom_call.1} parent=0
    _
  %s11 = ssub.s32 1, %s9
  %s12 = scalar_select 0, %s11, %s9
  $region1: #{tpu_custom_call.1} parent=0
    #allocation2 [shape = 'u8[4096]{0}', space=vmem, size = 0x1000, scoped, tag = 'output window, operand 0, single buffered']
    #allocation3 [shape = 's32[1]{0}', space=sflag, size = 0x4, scoped, tag = 'scoped memory for tpu_custom_call.1']
    %13 = vsyncpa [#allocation3], 0
    // Predicated region
    $region2: #{tpu_custom_call.1} parent=1 // pred_check
      _
    $region3: #{tpu_custom_call.1} parent=1 // pred_check_branch
      %15 = sbr.rel (0) target = $region5
    $region4: #{tpu_custom_call.1} parent=1 // pred_region
      _
    $region5: #{tpu_custom_call.1} parent=1 // pred_fallthru
      _
    // Predicated region
    $region6: #{tpu_custom_call.1} parent=1 // pred_check
      _
    $region7: #{tpu_custom_call.1} parent=1 // pred_check_branch
      %17 = sbr.rel (0) target = $region9
    $region8: #{tpu_custom_call.1} parent=1 // pred_region
      _
    $region9: #{tpu_custom_call.1} parent=1 // pred_fallthru
      _
    // Predicated region
    $region10: #{tpu_custom_call.1} parent=1 // pred_check
      _
    $region11: #{tpu_custom_call.1} parent=1 // pred_check_branch
      %19 = sbr.rel (0) target = $region13
    $region12: #{tpu_custom_call.1} parent=1 // pred_region
      _
    $region13: #{tpu_custom_call.1} parent=1 // pred_fallthru
      _
    // Predicated region
    $region14: #{tpu_custom_call.1} parent=1 // pred_check
      _
    $region15: #{tpu_custom_call.1} parent=1 // pred_check_branch
      %21 = sbr.rel (0) target = $region17
    $region16: #{tpu_custom_call.1} parent=1 // pred_region
      _
    $region17: #{tpu_custom_call.1} parent=1 // pred_fallthru
      _
    // Predicated region
    $region18: #{tpu_custom_call.1} parent=1 // pred_check
      _
    $region19: #{tpu_custom_call.1} parent=1 // pred_check_branch
      %23 = sbr.rel (0) target = $region21
    $region20: #{tpu_custom_call.1} parent=1 // pred_region
      _
    $region21: #{tpu_custom_call.1} parent=1 // pred_fallthru
      _
    // Predicated region
    $region22: #{tpu_custom_call.1} parent=1 // pred_check
      _
    $region23: #{tpu_custom_call.1} parent=1 // pred_check_branch
      %25 = sbr.rel (0) target = $region25
    $region24: #{tpu_custom_call.1} parent=1 // pred_region
      _
    $region25: #{tpu_custom_call.1} parent=1 // pred_fallthru
      _
    // Predicated region
    $region26: #{tpu_custom_call.1} parent=1 // pred_check
      _
    $region27: #{tpu_custom_call.1} parent=1 // pred_check_branch
      %27 = sbr.rel (0) target = $region29
    $region28: #{tpu_custom_call.1} parent=1 // pred_region
      _
    $region29: #{tpu_custom_call.1} parent=1 // pred_fallthru
      _
    // Predicated region
    $region30: #{tpu_custom_call.1} parent=1 // pred_check
      _
    $region31: #{tpu_custom_call.1} parent=1 // pred_check_branch
      %29 = sbr.rel (0) target = $region33
    $region32: #{tpu_custom_call.1} parent=1 // pred_region
      _
    $region33: #{tpu_custom_call.1} parent=1 // pred_fallthru
      _
    %v31 = vlaneseq
    %v32 = vand.u32 %v31, 127
    %vm33 = vcmp.lt.s32.totalorder %v32, 96
    %v34 = vsel %vm33, 0.5, 1.0
    %v35 = vsel %vm33, 0.5, 0.0
    %v36 = vld [vmem:[%s2] sm:$0xf]
    %v37 = vld [vmem:[%s2 + $0x4] sm:$0xf]
    %v38 = vld [vmem:[%s2 + $0x8] sm:$0xf]
    %v39 = vld [vmem:[%s2 + $0xc] sm:$0xf]
    %v40 = vld [vmem:[%s4] sm:$0xf]
    %v41 = vld [vmem:[%s4 + $0x4] sm:$0xf]
    %v42 = vld [vmem:[%s4 + $0x8] sm:$0xf]
    %v43 = vld [vmem:[%s4 + $0xc] sm:$0xf]
    %v44 = vld [vmem:[%s4 + $0x10] sm:$0xf]
    %v45 = vld [vmem:[%s4 + $0x14] sm:$0xf]
    %v46 = vld [vmem:[%s4 + $0x18] sm:$0xf]
    %v47 = vld [vmem:[%s4 + $0x1c] sm:$0xf]
    %v48 = vld [vmem:[%s5] sm:$0x1]
    %v50 = vperm.slane %v48, 0
    %v52 = vld [vmem:[%s0] sm:$0xf]
    %v53 = vld [vmem:[%s0 + $0x4] sm:$0xf]
    %v54 = vld [vmem:[%s0 + $0x8] sm:$0xf]
    %v55 = vld [vmem:[%s0 + $0xc] sm:$0xf]
    %v56 = vld [vmem:[%s0 + $0x10] sm:$0xf]
    %v57 = vld [vmem:[%s0 + $0x14] sm:$0xf]
    %v58 = vld [vmem:[%s0 + $0x18] sm:$0xf]
    %v59 = vld [vmem:[%s0 + $0x1c] sm:$0xf]
    %v60 = vld [vmem:[%s1] sm:$0x7]
    %v61 = vld [vmem:[%s3] sm:$0x1]
    %v63 = vperm.slane %v61, 0
    %v73 = vunpack.c.l.b16 %v52
    %v74 = vunpack.c.l.b16 %v53
    %v75 = vunpack.c.l.b16 %v54
    %v76 = vunpack.c.l.b16 %v55
    %v77 = vunpack.c.l.b16 %v56
    %v78 = vunpack.c.l.b16 %v57
    %v79 = vunpack.c.l.b16 %v58
    %v80 = vunpack.c.l.b16 %v59
    %v81 = vpack.c.b16 %v74, %v73
    %v82 = vpack.c.b16 %v76, %v75
    %v83 = vpack.c.b16 %v78, %v77
    %v84 = vpack.c.b16 %v80, %v79
    %vm85 = vcmask 48128
    %v87 = vsel %vm85, %v81, 0
    %v90 = vsel %vm85, %v82, 0
    %v93 = vsel %vm85, %v83, 0
    %v96 = vsel %vm85, %v84, 0
    %vm98 = vcmask 1042432
    %v100 = vsel %vm98, %v60, 0
    %102 = vmatpush.bf16.msra.mxu0 0
    %103 = vmatpush.bf16.msra.mxu0 0
    %104 = vmatpush.bf16.msra.mxu0 0
    %105 = vmatpush.bf16.msra.mxu0 0
    %106 = vmatpush.bf16.msra.mxu0 0
    %107 = vmatpush.bf16.msra.mxu0 0
    %108 = vmatpush.bf16.msra.mxu0 0
    %109 = vmatpush.bf16.msra.mxu0 %v100
    %110 = vmatmul.bf16.gmra.mxu0 %v87
    %v111 = vpop.f32.mrf.mxu0
    %v112 = vadd.f32 %v63, %v111
    %v113 = vpop.f32.mrf.mxu0
    %v114 = vadd.f32 %v63, %v113
    %115 = vmatmul.bf16.gmra.mxu0 %v90
    %v116 = vpop.f32.mrf.mxu0
    %v117 = vadd.f32 %v63, %v116
    %v118 = vpop.f32.mrf.mxu0
    %v119 = vadd.f32 %v63, %v118
    %120 = vmatmul.bf16.gmra.mxu0 %v93
    %v121 = vpop.f32.mrf.mxu0
    %v122 = vadd.f32 %v63, %v121
    %v123 = vpop.f32.mrf.mxu0
    %v124 = vadd.f32 %v63, %v123
    %125 = vmatmul.bf16.gmra.mxu0 %v96
    %v126 = vpop.f32.mrf.mxu0
    %v127 = vadd.f32 %v63, %v126
    %v128 = vpop.f32.mrf.mxu0
    %v129 = vadd.f32 %v63, %v128
    %130 = vdwg.mxu0
    %v131 = vmul.f32 %v112, %v34
    %v132 = vtanh.pop %v131
    %v133 = vmul.f32 %v132, %v34
    %v134 = vadd.f32 %v133, %v35
    %136 = vrot.lane.b32.xlu0 %v134, 32
    %v137 = vpop.permute.xlu0 %136
    %v139 = vmul.f32 %v134, %v137
    %v140 = vtanh.pop %v139
    %142 = vrot.lane.b32.xlu0 %v140, 64
    %v143 = vpop.permute.xlu0 %142
    %v145 = vmul.f32 %v134, %v143
    %v146 = vpack.c.bf16 %v145, %v145
    %148 = vrot.lane.b32.xlu0 %v146, 64
    %v149 = vpop.permute.xlu0 %148
    %v154 = vunpack.c.l.b16 %v40
    %v155 = vunpack.c.l.b16 %v41
    %v156 = vunpack.c.l.b16 %v42
    %v157 = vunpack.c.l.b16 %v43
    %v158 = vpack.c.b16 %v155, %v154
    %v159 = vpack.c.b16 %v157, %v156
    %vm162 = vcmask 261120
    %v164 = vsel %vm162, %v149, 0
    %166 = vmatpush.bf16.msra.mxu0 0
    %167 = vmatpush.bf16.msra.mxu0 0
    %168 = vmatpush.bf16.msra.mxu0 0
    %169 = vmatpush.bf16.msra.mxu0 0
    %170 = vmatpush.bf16.msra.mxu0 0
    %171 = vmatpush.bf16.msra.mxu0 0
    %172 = vmatpush.bf16.msra.mxu0 %v159
    %173 = vmatpush.bf16.msra.mxu0 %v158
    %174 = vmatmul.bf16.gmra.mxu0 %v164
    %v175 = vpop.f32.mrf.mxu0
    %v176 = vadd.f32 %v50, %v175
    %v177 = vpop.f32.mrf.mxu0
    %178 = vdwg.mxu0
    %v179 = vmul.f32 %v176, %v34
    %v180 = vtanh.pop %v179
    %v181 = vmul.f32 %v180, %v34
    %v182 = vadd.f32 %v181, %v35
    %184 = vrot.lane.b32.xlu0 %v182, 32
    %v185 = vpop.permute.xlu0 %184
    %v187 = vmul.f32 %v182, %v185
    %v188 = vtanh.pop %v187
    %190 = vrot.lane.b32.xlu0 %v188, 64
    %v191 = vpop.permute.xlu0 %190
    %v193 = vmul.f32 %v182, %v191
    %v198 = vunpack.c.l.b16 %v36
    %v199 = vunpack.c.l.b16 %v37
    %v200 = vunpack.c.l.b16 %v38
    %v201 = vunpack.c.l.b16 %v39
    %v202 = vpack.c.b16 %v199, %v198
    %v203 = vpack.c.b16 %v201, %v200
    %206 = vmatpush.bf16.msra.mxu0 0
    %207 = vmatpush.bf16.msra.mxu0 0
    %208 = vmatpush.bf16.msra.mxu0 0
    %209 = vmatpush.bf16.msra.mxu0 0
    %210 = vmatpush.bf16.msra.mxu0 0
    %211 = vmatpush.bf16.msra.mxu0 0
    %212 = vmatpush.bf16.msra.mxu0 %v203
    %213 = vmatpush.bf16.msra.mxu0 %v202
    %214 = vmatmul.bf16.gmra.mxu0 %v164
    %v215 = vpop.f32.mrf.mxu0
    %v216 = vadd.f32 0.0, %v215
    %v217 = vpop.f32.mrf.mxu0
    %218 = vdwg.mxu0
    %v219 = vadd.f32 %v114, %v216
    %v220 = vmul.f32 %v219, %v34
    %v221 = vtanh.pop %v220
    %v222 = vmul.f32 %v221, %v34
    %v223 = vadd.f32 %v222, %v35
    %225 = vrot.lane.b32.xlu0 %v139, 32
    %v226 = vpop.permute.xlu0 %225
    %v228 = vmul.f32 %v223, %v226
    %230 = vrot.lane.b32.xlu0 %v223, 32
    %v231 = vpop.permute.xlu0 %230
    %v233 = vmul.f32 %v223, %v231
    %235 = vrot.lane.b32.xlu0 %v233, 32
    %v236 = vpop.permute.xlu0 %235
    %v238 = vadd.f32 %v228, %v236
    %v239 = vtanh.pop %v238
    %241 = vrot.lane.b32.xlu0 %v239, 32
    %v242 = vpop.permute.xlu0 %241
    %v244 = vmul.f32 %v223, %v242
    %v245 = vpack.c.bf16 %v244, %v244
    %v246 = vpack.c.bf16 %v193, %v193
    %v248 = vunpack.c.l.b16 %v245
    %v249 = vpack.c.b16 %v248, %v248
    %250 = vrot.lane.b32.xlu0 %v249, 64
    %v251 = vpop.permute.xlu0 %250
    %v253 = vunpack.c.l.b16 %v246
    %v254 = vpack.c.b16 %v253, %v253
    %255 = vrot.lane.b32.xlu0 %v254, 96
    %v256 = vpop.permute.xlu0 %255
    %v259 = vsel %vm162, %v251, %v256
    %v264 = vunpack.c.l.b16 %v44
    %v265 = vunpack.c.l.b16 %v45
    %v266 = vunpack.c.l.b16 %v46
    %v267 = vunpack.c.l.b16 %v47
    %v268 = vpack.c.b16 %v265, %v264
    %v269 = vpack.c.b16 %v267, %v266
    %vm272 = vcmask 523264
    %v273 = vsel %vm272, %v259, 0
    %275 = vmatpush.bf16.msra.mxu0 0
    %276 = vmatpush.bf16.msra.mxu0 0
    %277 = vmatpush.bf16.msra.mxu0 0
    %278 = vmatpush.bf16.msra.mxu0 0
    %279 = vmatpush.bf16.msra.mxu0 %v269
    %280 = vmatpush.bf16.msra.mxu0 %v268
    %281 = vmatpush.bf16.msra.mxu0 %v159
    %282 = vmatpush.bf16.msra.mxu0 %v158
    %283 = vmatmul.bf16.gmra.mxu0 %v273
    %v284 = vpop.f32.mrf.mxu0
    %v285 = vadd.f32 %v50, %v284
    %v286 = vpop.f32.mrf.mxu0
    %287 = vdwg.mxu0
    %v288 = vmul.f32 %v285, %v34
    %v289 = vtanh.pop %v288
    %v290 = vmul.f32 %v289, %v34
    %v291 = vadd.f32 %v290, %v35
    %293 = vrot.lane.b32.xlu0 %v187, 32
    %v294 = vpop.permute.xlu0 %293
    %v296 = vmul.f32 %v291, %v294
    %298 = vrot.lane.b32.xlu0 %v291, 32
    %v299 = vpop.permute.xlu0 %298
    %v301 = vmul.f32 %v291, %v299
    %303 = vrot.lane.b32.xlu0 %v301, 32
    %v304 = vpop.permute.xlu0 %303
    %v306 = vadd.f32 %v296, %v304
    %v307 = vtanh.pop %v306
    %309 = vrot.lane.b32.xlu0 %v307, 32
    %v310 = vpop.permute.xlu0 %309
    %v312 = vmul.f32 %v291, %v310
    %v313 = vsel %vm162, %v251, 0
    %315 = vmatpush.bf16.msra.mxu0 0
    %316 = vmatpush.bf16.msra.mxu0 0
    %317 = vmatpush.bf16.msra.mxu0 0
    %318 = vmatpush.bf16.msra.mxu0 0
    %319 = vmatpush.bf16.msra.mxu0 0
    %320 = vmatpush.bf16.msra.mxu0 0
    %321 = vmatpush.bf16.msra.mxu0 %v203
    %322 = vmatpush.bf16.msra.mxu0 %v202
    %323 = vmatmul.bf16.gmra.mxu0 %v313
    %v324 = vpop.f32.mrf.mxu0
    %v325 = vadd.f32 0.0, %v324
    %v326 = vpop.f32.mrf.mxu0
    %327 = vdwg.mxu0
    %v328 = vadd.f32 %v117, %v325
    %v329 = vmul.f32 %v328, %v34
    %v330 = vtanh.pop %v329
    %v331 = vmul.f32 %v330, %v34
    %v332 = vadd.f32 %v331, %v35
    %v333 = vmul.f32 %v332, %v238
    %335 = vrot.lane.b32.xlu0 %v332, 32
    %v336 = vpop.permute.xlu0 %335
    %v338 = vmul.f32 %v332, %v336
    %340 = vrot.lane.b32.xlu0 %v338, 32
    %v341 = vpop.permute.xlu0 %340
    %v343 = vadd.f32 %v333, %v341
    %v344 = vtanh.pop %v343
    %346 = vrot.lane.b32.xlu0 %v344, 32
    %v347 = vpop.permute.xlu0 %346
    %v349 = vmul.f32 %v332, %v347
    %v350 = vpack.c.bf16 %v349, %v349
    %v351 = vpack.c.bf16 %v312, %v312
    %v353 = vunpack.c.l.b16 %v350
    %v354 = vpack.c.b16 %v353, %v353
    %355 = vrot.lane.b32.xlu0 %v354, 64
    %v356 = vpop.permute.xlu0 %355
    %v358 = vunpack.c.l.b16 %v351
    %v359 = vpack.c.b16 %v358, %v358
    %360 = vrot.lane.b32.xlu0 %v359, 96
    %v361 = vpop.permute.xlu0 %360
    %v364 = vsel %vm162, %v356, %v361
    %v365 = vsel %vm272, %v364, 0
    %367 = vmatpush.bf16.msra.mxu0 0
    %368 = vmatpush.bf16.msra.mxu0 0
    %369 = vmatpush.bf16.msra.mxu0 0
    %370 = vmatpush.bf16.msra.mxu0 0
    %371 = vmatpush.bf16.msra.mxu0 %v269
    %372 = vmatpush.bf16.msra.mxu0 %v268
    %373 = vmatpush.bf16.msra.mxu0 %v159
    %374 = vmatpush.bf16.msra.mxu0 %v158
    %375 = vmatmul.bf16.gmra.mxu0 %v365
    %v376 = vpop.f32.mrf.mxu0
    %v377 = vadd.f32 %v50, %v376
    %v378 = vpop.f32.mrf.mxu0
    %379 = vdwg.mxu0
    %v380 = vmul.f32 %v377, %v34
    %v381 = vtanh.pop %v380
    %v382 = vmul.f32 %v381, %v34
    %v383 = vadd.f32 %v382, %v35
    %v384 = vmul.f32 %v383, %v306
    %386 = vrot.lane.b32.xlu0 %v383, 32
    %v387 = vpop.permute.xlu0 %386
    %v389 = vmul.f32 %v383, %v387
    %391 = vrot.lane.b32.xlu0 %v389, 32
    %v392 = vpop.permute.xlu0 %391
    %v394 = vadd.f32 %v384, %v392
    %v395 = vtanh.pop %v394
    %397 = vrot.lane.b32.xlu0 %v395, 32
    %v398 = vpop.permute.xlu0 %397
    %v400 = vmul.f32 %v383, %v398
    %v401 = vsel %vm162, %v356, 0
    %403 = vmatpush.bf16.msra.mxu0 0
    %404 = vmatpush.bf16.msra.mxu0 0
    %405 = vmatpush.bf16.msra.mxu0 0
    %406 = vmatpush.bf16.msra.mxu0 0
    %407 = vmatpush.bf16.msra.mxu0 0
    %408 = vmatpush.bf16.msra.mxu0 0
    %409 = vmatpush.bf16.msra.mxu0 %v203
    %410 = vmatpush.bf16.msra.mxu0 %v202
    %411 = vmatmul.bf16.gmra.mxu0 %v401
    %v412 = vpop.f32.mrf.mxu0
    %v413 = vadd.f32 0.0, %v412
    %v414 = vpop.f32.mrf.mxu0
    %415 = vdwg.mxu0
    %v416 = vadd.f32 %v119, %v413
    %v417 = vmul.f32 %v416, %v34
    %v418 = vtanh.pop %v417
    %v419 = vmul.f32 %v418, %v34
    %v420 = vadd.f32 %v419, %v35
    %v421 = vmul.f32 %v420, %v343
    %423 = vrot.lane.b32.xlu0 %v420, 32
    %v424 = vpop.permute.xlu0 %423
    %v426 = vmul.f32 %v420, %v424
    %428 = vrot.lane.b32.xlu0 %v426, 32
    %v429 = vpop.permute.xlu0 %428
    %v431 = vadd.f32 %v421, %v429
    %v432 = vtanh.pop %v431
    %434 = vrot.lane.b32.xlu0 %v432, 32
    %v435 = vpop.permute.xlu0 %434
    %v437 = vmul.f32 %v420, %v435
    %v438 = vpack.c.bf16 %v437, %v437
    %v439 = vpack.c.bf16 %v400, %v400
    %v441 = vunpack.c.l.b16 %v438
    %v442 = vpack.c.b16 %v441, %v441
    %443 = vrot.lane.b32.xlu0 %v442, 64
    %v444 = vpop.permute.xlu0 %443
    %v446 = vunpack.c.l.b16 %v439
    %v447 = vpack.c.b16 %v446, %v446
    %448 = vrot.lane.b32.xlu0 %v447, 96
    %v449 = vpop.permute.xlu0 %448
    %v452 = vsel %vm162, %v444, %v449
    %v453 = vsel %vm272, %v452, 0
    %455 = vmatpush.bf16.msra.mxu0 0
    %456 = vmatpush.bf16.msra.mxu0 0
    %457 = vmatpush.bf16.msra.mxu0 0
    %458 = vmatpush.bf16.msra.mxu0 0
    %459 = vmatpush.bf16.msra.mxu0 %v269
    %460 = vmatpush.bf16.msra.mxu0 %v268
    %461 = vmatpush.bf16.msra.mxu0 %v159
    %462 = vmatpush.bf16.msra.mxu0 %v158
    %463 = vmatmul.bf16.gmra.mxu0 %v453
    %v464 = vpop.f32.mrf.mxu0
    %v465 = vadd.f32 %v50, %v464
    %v466 = vpop.f32.mrf.mxu0
    %467 = vdwg.mxu0
    %v468 = vmul.f32 %v465, %v34
    %v469 = vtanh.pop %v468
    %v470 = vmul.f32 %v469, %v34
    %v471 = vadd.f32 %v470, %v35
    %v472 = vmul.f32 %v471, %v394
    %474 = vrot.lane.b32.xlu0 %v471, 32
    %v475 = vpop.permute.xlu0 %474
    %v477 = vmul.f32 %v471, %v475
    %479 = vrot.lane.b32.xlu0 %v477, 32
    %v480 = vpop.permute.xlu0 %479
    %v482 = vadd.f32 %v472, %v480
    %v483 = vtanh.pop %v482
    %485 = vrot.lane.b32.xlu0 %v483, 32
    %v486 = vpop.permute.xlu0 %485
    %v488 = vmul.f32 %v471, %v486
    %v489 = vsel %vm162, %v444, 0
    %491 = vmatpush.bf16.msra.mxu0 0
    %492 = vmatpush.bf16.msra.mxu0 0
    %493 = vmatpush.bf16.msra.mxu0 0
    %494 = vmatpush.bf16.msra.mxu0 0
    %495 = vmatpush.bf16.msra.mxu0 0
    %496 = vmatpush.bf16.msra.mxu0 0
    %497 = vmatpush.bf16.msra.mxu0 %v203
    %498 = vmatpush.bf16.msra.mxu0 %v202
    %499 = vmatmul.bf16.gmra.mxu0 %v489
    %v500 = vpop.f32.mrf.mxu0
    %v501 = vadd.f32 0.0, %v500
    %v502 = vpop.f32.mrf.mxu0
    %503 = vdwg.mxu0
    %v504 = vadd.f32 %v122, %v501
    %v505 = vmul.f32 %v504, %v34
    %v506 = vtanh.pop %v505
    %v507 = vmul.f32 %v506, %v34
    %v508 = vadd.f32 %v507, %v35
    %v509 = vmul.f32 %v508, %v431
    %511 = vrot.lane.b32.xlu0 %v508, 32
    %v512 = vpop.permute.xlu0 %511
    %v514 = vmul.f32 %v508, %v512
    %516 = vrot.lane.b32.xlu0 %v514, 32
    %v517 = vpop.permute.xlu0 %516
    %v519 = vadd.f32 %v509, %v517
    %v520 = vtanh.pop %v519
    %522 = vrot.lane.b32.xlu0 %v520, 32
    %v523 = vpop.permute.xlu0 %522
    %v525 = vmul.f32 %v508, %v523
    %v526 = vpack.c.bf16 %v525, %v525
    %v527 = vpack.c.bf16 %v488, %v488
    %v529 = vunpack.c.l.b16 %v526
    %v530 = vpack.c.b16 %v529, %v529
    %531 = vrot.lane.b32.xlu0 %v530, 64
    %v532 = vpop.permute.xlu0 %531
    %v534 = vunpack.c.l.b16 %v527
    %v535 = vpack.c.b16 %v534, %v534
    %536 = vrot.lane.b32.xlu0 %v535, 96
    %v537 = vpop.permute.xlu0 %536
    %v540 = vsel %vm162, %v532, %v537
    %v541 = vsel %vm272, %v540, 0
    %543 = vmatpush.bf16.msra.mxu0 0
    %544 = vmatpush.bf16.msra.mxu0 0
    %545 = vmatpush.bf16.msra.mxu0 0
    %546 = vmatpush.bf16.msra.mxu0 0
    %547 = vmatpush.bf16.msra.mxu0 %v269
    %548 = vmatpush.bf16.msra.mxu0 %v268
    %549 = vmatpush.bf16.msra.mxu0 %v159
    %550 = vmatpush.bf16.msra.mxu0 %v158
    %551 = vmatmul.bf16.gmra.mxu0 %v541
    %v552 = vpop.f32.mrf.mxu0
    %v553 = vadd.f32 %v50, %v552
    %v554 = vpop.f32.mrf.mxu0
    %555 = vdwg.mxu0
    %v556 = vmul.f32 %v553, %v34
    %v557 = vtanh.pop %v556
    %v558 = vmul.f32 %v557, %v34
    %v559 = vadd.f32 %v558, %v35
    %v560 = vmul.f32 %v559, %v482
    %562 = vrot.lane.b32.xlu0 %v559, 32
    %v563 = vpop.permute.xlu0 %562
    %v565 = vmul.f32 %v559, %v563
    %567 = vrot.lane.b32.xlu0 %v565, 32
    %v568 = vpop.permute.xlu0 %567
    %v570 = vadd.f32 %v560, %v568
    %v571 = vtanh.pop %v570
    %573 = vrot.lane.b32.xlu0 %v571, 32
    %v574 = vpop.permute.xlu0 %573
    %v576 = vmul.f32 %v559, %v574
    %v577 = vsel %vm162, %v532, 0
    %579 = vmatpush.bf16.msra.mxu0 0
    %580 = vmatpush.bf16.msra.mxu0 0
    %581 = vmatpush.bf16.msra.mxu0 0
    %582 = vmatpush.bf16.msra.mxu0 0
    %583 = vmatpush.bf16.msra.mxu0 0
    %584 = vmatpush.bf16.msra.mxu0 0
    %585 = vmatpush.bf16.msra.mxu0 %v203
    %586 = vmatpush.bf16.msra.mxu0 %v202
    %587 = vmatmul.bf16.gmra.mxu0 %v577
    %v588 = vpop.f32.mrf.mxu0
    %v589 = vadd.f32 0.0, %v588
    %v590 = vpop.f32.mrf.mxu0
    %591 = vdwg.mxu0
    %v592 = vadd.f32 %v124, %v589
    %v593 = vmul.f32 %v592, %v34
    %v594 = vtanh.pop %v593
    %v595 = vmul.f32 %v594, %v34
    %v596 = vadd.f32 %v595, %v35
    %v597 = vmul.f32 %v596, %v519
    %599 = vrot.lane.b32.xlu0 %v596, 32
    %v600 = vpop.permute.xlu0 %599
    %v602 = vmul.f32 %v596, %v600
    %604 = vrot.lane.b32.xlu0 %v602, 32
    %v605 = vpop.permute.xlu0 %604
    %v607 = vadd.f32 %v597, %v605
    %v608 = vtanh.pop %v607
    %610 = vrot.lane.b32.xlu0 %v608, 32
    %v611 = vpop.permute.xlu0 %610
    %v613 = vmul.f32 %v596, %v611
    %v614 = vpack.c.bf16 %v613, %v613
    %v615 = vpack.c.bf16 %v576, %v576
    %v617 = vunpack.c.l.b16 %v614
    %v618 = vpack.c.b16 %v617, %v617
    %619 = vrot.lane.b32.xlu0 %v618, 64
    %v620 = vpop.permute.xlu0 %619
    %v622 = vunpack.c.l.b16 %v615
    %v623 = vpack.c.b16 %v622, %v622
    %624 = vrot.lane.b32.xlu0 %v623, 96
    %v625 = vpop.permute.xlu0 %624
    %v628 = vsel %vm162, %v620, %v625
    %v629 = vsel %vm272, %v628, 0
    %631 = vmatpush.bf16.msra.mxu0 0
    %632 = vmatpush.bf16.msra.mxu0 0
    %633 = vmatpush.bf16.msra.mxu0 0
    %634 = vmatpush.bf16.msra.mxu0 0
    %635 = vmatpush.bf16.msra.mxu0 %v269
    %636 = vmatpush.bf16.msra.mxu0 %v268
    %637 = vmatpush.bf16.msra.mxu0 %v159
    %638 = vmatpush.bf16.msra.mxu0 %v158
    %639 = vmatmul.bf16.gmra.mxu0 %v629
    %v640 = vpop.f32.mrf.mxu0
    %v641 = vadd.f32 %v50, %v640
    %v642 = vpop.f32.mrf.mxu0
    %643 = vdwg.mxu0
    %v644 = vmul.f32 %v641, %v34
    %v645 = vtanh.pop %v644
    %v646 = vmul.f32 %v645, %v34
    %v647 = vadd.f32 %v646, %v35
    %v648 = vmul.f32 %v647, %v570
    %650 = vrot.lane.b32.xlu0 %v647, 32
    %v651 = vpop.permute.xlu0 %650
    %v653 = vmul.f32 %v647, %v651
    %655 = vrot.lane.b32.xlu0 %v653, 32
    %v656 = vpop.permute.xlu0 %655
    %v658 = vadd.f32 %v648, %v656
    %v659 = vtanh.pop %v658
    %661 = vrot.lane.b32.xlu0 %v659, 32
    %v662 = vpop.permute.xlu0 %661
    %v664 = vmul.f32 %v647, %v662
    %v665 = vsel %vm162, %v620, 0
    %667 = vmatpush.bf16.msra.mxu0 0
    %668 = vmatpush.bf16.msra.mxu0 0
    %669 = vmatpush.bf16.msra.mxu0 0
    %670 = vmatpush.bf16.msra.mxu0 0
    %671 = vmatpush.bf16.msra.mxu0 0
    %672 = vmatpush.bf16.msra.mxu0 0
    %673 = vmatpush.bf16.msra.mxu0 %v203
    %674 = vmatpush.bf16.msra.mxu0 %v202
    %675 = vmatmul.bf16.gmra.mxu0 %v665
    %v676 = vpop.f32.mrf.mxu0
    %v677 = vadd.f32 0.0, %v676
    %v678 = vpop.f32.mrf.mxu0
    %679 = vdwg.mxu0
    %v680 = vadd.f32 %v127, %v677
    %v681 = vmul.f32 %v680, %v34
    %v682 = vtanh.pop %v681
    %v683 = vmul.f32 %v682, %v34
    %v684 = vadd.f32 %v683, %v35
    %v685 = vmul.f32 %v684, %v607
    %687 = vrot.lane.b32.xlu0 %v684, 32
    %v688 = vpop.permute.xlu0 %687
    %v690 = vmul.f32 %v684, %v688
    %692 = vrot.lane.b32.xlu0 %v690, 32
    %v693 = vpop.permute.xlu0 %692
    %v695 = vadd.f32 %v685, %v693
    %v696 = vtanh.pop %v695
    %698 = vrot.lane.b32.xlu0 %v696, 32
    %v699 = vpop.permute.xlu0 %698
    %v701 = vmul.f32 %v684, %v699
    %v702 = vpack.c.bf16 %v701, %v701
    %v703 = vpack.c.bf16 %v664, %v664
    %v705 = vunpack.c.l.b16 %v702
    %v706 = vpack.c.b16 %v705, %v705
    %707 = vrot.lane.b32.xlu0 %v706, 64
    %v708 = vpop.permute.xlu0 %707
    %v710 = vunpack.c.l.b16 %v703
    %v711 = vpack.c.b16 %v710, %v710
    %712 = vrot.lane.b32.xlu0 %v711, 96
    %v713 = vpop.permute.xlu0 %712
    %v716 = vsel %vm162, %v708, %v713
    %v717 = vsel %vm272, %v716, 0
    %719 = vmatpush.bf16.msra.mxu0 0
    %720 = vmatpush.bf16.msra.mxu0 0
    %721 = vmatpush.bf16.msra.mxu0 0
    %722 = vmatpush.bf16.msra.mxu0 0
    %723 = vmatpush.bf16.msra.mxu0 %v269
    %724 = vmatpush.bf16.msra.mxu0 %v268
    %725 = vmatpush.bf16.msra.mxu0 %v159
    %726 = vmatpush.bf16.msra.mxu0 %v158
    %727 = vmatmul.bf16.gmra.mxu0 %v717
    %v728 = vpop.f32.mrf.mxu0
    %v729 = vadd.f32 %v50, %v728
    %v730 = vpop.f32.mrf.mxu0
    %731 = vdwg.mxu0
    %v732 = vmul.f32 %v729, %v34
    %v733 = vtanh.pop %v732
    %v734 = vmul.f32 %v733, %v34
    %v735 = vadd.f32 %v734, %v35
    %v736 = vmul.f32 %v735, %v658
    %738 = vrot.lane.b32.xlu0 %v735, 32
    %v739 = vpop.permute.xlu0 %738
    %v741 = vmul.f32 %v735, %v739
    %743 = vrot.lane.b32.xlu0 %v741, 32
    %v744 = vpop.permute.xlu0 %743
    %v746 = vadd.f32 %v736, %v744
    %v747 = vtanh.pop %v746
    %749 = vrot.lane.b32.xlu0 %v747, 32
    %v750 = vpop.permute.xlu0 %749
    %v752 = vmul.f32 %v735, %v750
    %v753 = vsel %vm162, %v708, 0
    %755 = vmatpush.bf16.msra.mxu0 0
    %756 = vmatpush.bf16.msra.mxu0 0
    %757 = vmatpush.bf16.msra.mxu0 0
    %758 = vmatpush.bf16.msra.mxu0 0
    %759 = vmatpush.bf16.msra.mxu0 0
    %760 = vmatpush.bf16.msra.mxu0 0
    %761 = vmatpush.bf16.msra.mxu0 %v203
    %762 = vmatpush.bf16.msra.mxu0 %v202
    %763 = vmatmul.bf16.gmra.mxu0 %v753
    %v764 = vpop.f32.mrf.mxu0
    %v765 = vadd.f32 0.0, %v764
    %v766 = vpop.f32.mrf.mxu0
    %767 = vdwg.mxu0
    %v768 = vadd.f32 %v129, %v765
    %v769 = vmul.f32 %v768, %v34
    %v770 = vtanh.pop %v769
    %v771 = vmul.f32 %v770, %v34
    %v772 = vadd.f32 %v771, %v35
    %v773 = vmul.f32 %v772, %v695
    %775 = vrot.lane.b32.xlu0 %v772, 32
    %v776 = vpop.permute.xlu0 %775
    %v778 = vmul.f32 %v772, %v776
    %780 = vrot.lane.b32.xlu0 %v778, 32
    %v781 = vpop.permute.xlu0 %780
    %v783 = vadd.f32 %v773, %v781
    %v784 = vtanh.pop %v783
    %786 = vrot.lane.b32.xlu0 %v784, 32
    %v787 = vpop.permute.xlu0 %786
    %v789 = vmul.f32 %v772, %v787
    %v790 = vpack.c.bf16 %v789, %v789
    %v791 = vpack.c.bf16 %v752, %v752
    %v793 = vunpack.c.l.b16 %v790
    %v794 = vpack.c.b16 %v793, %v793
    %795 = vrot.lane.b32.xlu0 %v794, 64
    %v796 = vpop.permute.xlu0 %795
    %v798 = vunpack.c.l.b16 %v791
    %v799 = vpack.c.b16 %v798, %v798
    %800 = vrot.lane.b32.xlu0 %v799, 96
    %v801 = vpop.permute.xlu0 %800
    %v804 = vsel %vm162, %v796, %v801
    %v805 = vsel %vm272, %v804, 0
    %807 = vmatpush.bf16.msra.mxu0 0
    %808 = vmatpush.bf16.msra.mxu0 0
    %809 = vmatpush.bf16.msra.mxu0 0
    %810 = vmatpush.bf16.msra.mxu0 0
    %811 = vmatpush.bf16.msra.mxu0 %v269
    %812 = vmatpush.bf16.msra.mxu0 %v268
    %813 = vmatpush.bf16.msra.mxu0 %v159
    %814 = vmatpush.bf16.msra.mxu0 %v158
    %815 = vmatmul.bf16.gmra.mxu0 %v805
    %v816 = vpop.f32.mrf.mxu0
    %v817 = vadd.f32 %v50, %v816
    %v818 = vpop.f32.mrf.mxu0
    %819 = vdwg.mxu0
    %v820 = vmul.f32 %v817, %v34
    %v821 = vtanh.pop %v820
    %v822 = vmul.f32 %v821, %v34
    %v823 = vadd.f32 %v822, %v35
    %v824 = vmul.f32 %v823, %v746
    %826 = vrot.lane.b32.xlu0 %v823, 32
    %v827 = vpop.permute.xlu0 %826
    %v829 = vmul.f32 %v823, %v827
    %831 = vrot.lane.b32.xlu0 %v829, 32
    %v832 = vpop.permute.xlu0 %831
    %v834 = vadd.f32 %v824, %v832
    %v835 = vtanh.pop %v834
    %837 = vrot.lane.b32.xlu0 %v835, 32
    %v838 = vpop.permute.xlu0 %837
    %v840 = vmul.f32 %v823, %v838
    %v841 = vld [vmem:[%s6] sm:$0xff]
    %v842 = vld [vmem:[%s6 + $0x8] sm:$0xff]
    %v843 = vld [vmem:[%s6 + $0x10] sm:$0xff]
    %v844 = vld [vmem:[%s6 + $0x18] sm:$0xff]
    %v845 = vld [vmem:[%s7] sm:$0x1]
    %v847 = vperm.slane %v845, 0
    %850 = vrot.lane.b32.xlu0 %v840, 64
    %v851 = vpop.permute.xlu0 %850
    %v852 = vsel %vm162, %v851, 0
    %854 = vmatpush.msra.mxu0 0.0
    %855 = vmatpush.msra.mxu0 0.0
    %856 = vmatpush.msra.mxu0 0.0
    %857 = vmatpush.msra.mxu0 0.0
    %858 = vmatpush.msra.mxu0 0.0
    %859 = vmatpush.msra.mxu0 0.0
    %860 = vmatpush.msra.mxu0 0.0
    %861 = vmatpush.msra.mxu0 0.0
    %862 = vmatpush.msra.mxu0 0.0
    %863 = vmatpush.msra.mxu0 0.0
    %864 = vmatpush.msra.mxu0 0.0
    %865 = vmatpush.msra.mxu0 0.0
    %866 = vmatpush.msra.mxu0 %v844
    %867 = vmatpush.msra.mxu0 %v843
    %868 = vmatpush.msra.mxu0 %v842
    %869 = vmatpush.msra.mxu0 %v841
    %870 = vmatmul.f32.gmra.mxu0 %v852
    %v871 = vpop.f32.mrf.mxu0
    %v872 = vadd.f32 %v847, %v871
    %873 = vdwg.mxu0
    %874 = vst.msk [vmem:[#allocation2] sm:$0xff] %vm85, %v872
    // Predicated region
    $region34: #{tpu_custom_call.1} parent=1 // pred_check
      _
    $region35: #{tpu_custom_call.1} parent=1 // pred_check_branch
      %876 = sbr.rel (0) target = $region37
    $region36: #{tpu_custom_call.1} parent=1 // pred_region
      %878 = vsyncadd [#allocation3], 0
      %s880 = sshll.u32 [#allocation2], 4
      %s881 = int_to_ptr.vmem [resolvable:$true] %s880
      %s882 = sshll.u32 %s8, 4
      %s883 = int_to_ptr.hbm [resolvable:$true] %s882
      %885 = dma.vmem_to_hbm [thread:$0]  %s881, 128, %s883, [#allocation3]
    $region37: #{tpu_custom_call.1} parent=1 // pred_fallthru
      _
    // Predicated region
    $region38: #{tpu_custom_call.1} parent=1 // pred_check
      _
    $region39: #{tpu_custom_call.1} parent=1 // pred_check_branch
      %887 = sbr.rel (0) target = $region41
    $region40: #{tpu_custom_call.1} parent=1 // pred_region
      %889 = dma.done [#allocation3], 128
    $region41: #{tpu_custom_call.1} parent=1 // pred_fallthru
      _
    %890 = vsyncpa [#allocation3], 1

</llo_original>
